<compile_context>
chip_gen: v7x
topology: tpu7x:2x2x1
jax: 0.10.0
libtpu: 0.0.40
codegen_flags: <defaults>
</compile_context>

<pallas_src>
import functools
import math

import jax
import jax.numpy as jnp
from jax import lax
from jax.experimental import pallas as pl
from jax.experimental.pallas import tpu as pltpu

KK = 6
TEMP = 31


# ----------------------------------------------------------------------------
# Pallas kernel: transposed conv-as-matmul + attention-weighted K-reduction
# ----------------------------------------------------------------------------
def _dynconv_kernel(p_ref, w_ref, a_ref, o_ref, *, K, O, rep):
    # p_ref: (1, P, TM) bf16   patches^T tile   (TM = rep * Wo lanes)
    # w_ref: (K*O, P)   bf16   expert weights (resident across the grid)
    # a_ref: (1, K, Wo) f32    softmax attention for this batch (time axis only)
    # o_ref: (1, O, TM)        lane-dense output tile
    conv = jnp.dot(w_ref[...], p_ref[0],
                   preferred_element_type=jnp.float32)          # (K*O, TM) f32

    att = a_ref[0].astype(jnp.float32)                          # (K, Wo)
    if rep > 1:
        # Broadcast over the Ho rows covered by this tile (lane replication;
        # column m = ho*Wo + wo only depends on wo for the attention).
        att = jnp.tile(att, (1, rep))                            # (K, TM)

    tm = conv.shape[-1]
    conv3 = conv.reshape(K, O, tm)                               # sublane-grouped view
    out = jnp.sum(conv3 * att[:, None, :], axis=0)               # (O, TM), VPU only
    o_ref[0] = out.astype(o_ref.dtype)


# ----------------------------------------------------------------------------
# Glue: im2col (transposed layout), attention branch, tiling heuristics
# ----------------------------------------------------------------------------
def _im2col_t(x, kh, kw, sh, sw, ph, pw):
    """Returns patches^T of shape (B, P, M), P = Cin*kh*kw (row = c*kh*kw + i*kw + j),
    M = Ho*Wo (column = ho*Wo + wo)."""
    B, C, H, W = x.shape
    Ho = (H + 2 * ph - kh) // sh + 1
    Wo = (W + 2 * pw - kw) // sw + 1
    xp = jnp.pad(x, ((0, 0), (0, 0), (ph, ph), (pw, pw)))
    cols = []
    for i in range(kh):
        for j in range(kw):
            cols.append(xp[:, :, i:i + Ho * sh:sh, j:j + Wo * sw:sw])  # (B,C,Ho,Wo)
    pat = jnp.stack(cols, axis=2)                                      # (B,C,kh*kw,Ho,Wo)
    pat = pat.reshape(B, C * kh * kw, Ho * Wo)                         # (B, P, M)
    return pat, Ho, Wo


def _pick_row_tile(B, Ho, Wo, target_lanes=512):
    """Choose TH (whole Ho rows per tile) so the lane width TH*Wo is 128-aligned
    (or the full map), close to `target_lanes`, and the grid has >=4 steps when
    that is possible without dropping below 128 lanes."""
    cands = []
    for th in range(1, Ho + 1):
        if Ho % th:
            continue
        lanes = th * Wo
        if lanes % 128 == 0 or th == Ho:
            cands.append(th)
    lanes = lambda th: th * Wo
    under = [th for th in cands if lanes(th) <= target_lanes]
    pool = under if under else [min(cands, key=lanes)]
    good = [th for th in pool if B * (Ho // th) >= 4 and lanes(th) >= 128]
    pool = good if good else pool
    return max(pool, key=lanes)


def _conv1d(x3, w3, stride, pad, bias=None):
    # x3: (B, C, T), w3: (O, I, k)  -- implemented via a dummy 2-D conv
    y = lax.conv_general_dilated(
        x3[:, :, None, :], w3[:, :, None, :],
        window_strides=(1, stride), padding=[(0, 0), (pad, pad)],
        dimension_numbers=('NCHW', 'OIHW', 'NCHW'))
    y = y[:, :, 0, :]
    if bias is not None:
        y = y + bias[None, :, None]
    return y


def _attention_logits(x, params, *, kernel_size, stride, padding):
    """attention2d up to (and excluding) the softmax: returns fc2 logits (B, K, T)."""
    B, C, H, W = x.shape
    x3 = x.reshape(B, C * H, W)
    y = _conv1d(x3, params['fc1_w'], stride, padding)                  # (B, hidden, T)
    y = (y - params['bn_mean'][None, :, None]) / jnp.sqrt(
        params['bn_var'][None, :, None] + 1e-5)
    y = y * params['bn_gamma'][None, :, None] + params['bn_beta'][None, :, None]
    y = jnp.maximum(y, 0.0)
    z = _conv1d(y, params['fc2_w'], 1, 1, bias=params['fc2_b'])        # (B, K, T)
    return z


def dynamic_conv2d(x, params, *, kernel_size, stride, padding, K, temperature,
                   compute_dtype=jnp.bfloat16):
    B, Cin, H, W = x.shape
    kh, kw = kernel_size
    sh, sw = stride
    ph, pw = padding
    O = params['weight'].shape[1]

    # attention branch (tiny): logits -> temperature softmax over K, in plain JAX
    logits = _attention_logits(x, params, kernel_size=kw, stride=sw, padding=pw)
    att = jax.nn.softmax(logits.astype(jnp.float32) / float(temperature), axis=1)  # (B,K,Wo)

    # im2col for the big grouped conv, already in the transposed (P, M) layout
    patches_t, Ho, Wo = _im2col_t(x, kh, kw, sh, sw, ph, pw)           # (B, P, M)
    assert att.shape[-1] == Wo
    M = Ho * Wo
    P = Cin * kh * kw
    KO = K * O

    # (K, O, Cin, kh, kw) -> (K*O, Cin*kh*kw)  (row index k*O + o, matching torch view)
    w_mat = params['weight'].reshape(KO, P)

    # bf16 for the dominant HBM traffic; MXU accumulates in f32 inside the kernel.
    patches_t = patches_t.astype(compute_dtype)
    w_mat = w_mat.astype(compute_dtype)

    # tile whole Ho rows so the attention broadcast inside the kernel is exact
    TH = _pick_row_tile(B, Ho, Wo)
    TM = TH * Wo
    grid = (B, Ho // TH)

    kernel = functools.partial(_dynconv_kernel, K=K, O=O, rep=TH)

    in_itemsize = jnp.dtype(compute_dtype).itemsize
    out_itemsize = jnp.dtype(x.dtype).itemsize
    cost = pl.CostEstimate(
        flops=2 * B * M * P * KO + 2 * B * M * KO,
        transcendentals=0,
        bytes_accessed=(B * M * P * in_itemsize + KO * P * in_itemsize
                        + B * K * Wo * 4 + B * M * O * out_itemsize))

    block_bytes = (P * TM * in_itemsize + KO * P * in_itemsize
                   + K * Wo * 4 + O * TM * out_itemsize)
    vmem_limit = int(min(48 * 2**20, max(16 * 2**20, 8 * block_bytes)))

    out_rows = pl.pallas_call(
        kernel,
        out_shape=jax.ShapeDtypeStruct((B, O, M), x.dtype),
        grid_spec=pltpu.PrefetchScalarGridSpec(
            num_scalar_prefetch=0,
            grid=grid,
            in_specs=[
                pl.BlockSpec((1, P, TM), lambda b, t: (b, 0, t)),   # patches^T tile
                pl.BlockSpec((KO, P), lambda b, t: (0, 0)),         # weights (resident)
                pl.BlockSpec((1, K, Wo), lambda b, t: (b, 0, 0)),   # attention (time only)
            ],
            out_specs=pl.BlockSpec((1, O, TM), lambda b, t: (b, 0, t)),
        ),
        compiler_params=pltpu.CompilerParams(
            dimension_semantics=("parallel", "parallel"),
            vmem_limit_bytes=vmem_limit),
        cost_estimate=cost,
    )(patches_t, w_mat, att)

    # (B, O, M) is already NCHW-flat -> pure metadata reshape, no transpose
    return out_rows.reshape(B, O, Ho, Wo)


# ----------------------------------------------------------------------------
# Pure-JAX f32 reference (mirrors the torch forward) for verification
# ----------------------------------------------------------------------------
def _reference_forward(x, params, *, kernel_size, stride, padding, K, temperature):
    B, Cin, H, W = x.shape
    O = params['weight'].shape[1]
    logits = _attention_logits(x, params, kernel_size=kernel_size[1],
                               stride=stride[1], padding=padding[1])
    att = jax.nn.softmax(logits / temperature, axis=1)                 # (B, K, T)
    agg_w = params['weight'].reshape(K * O, Cin, *kernel_size)
    conv = lax.conv_general_dilated(
        x, agg_w, window_strides=stride,
        padding=[(padding[0], padding[0]), (padding[1], padding[1])],
        dimension_numbers=('NCHW', 'OIHW', 'NCHW'))                    # (B, K*O, Ho, Wo)
    Ho, Wo = conv.shape[-2], conv.shape[-1]
    conv5 = conv.reshape(B, K, O, Ho, Wo)
    return jnp.einsum('bkcft,bkt->bcft', conv5, att)


if __name__ == "__main__":
    B, Cin, O, H, W = 2, 4, 8, 16, 16
    map_size = H
    kh = kw = 3
    stride = (1, 1)
    padding = (1, 1)
    K = KK
    temperature = TEMP

    start_planes = Cin * map_size          # 64
    hidden = start_planes // 8             # 8

    key = jax.random.PRNGKey(0)
    k1, k2, k3, kx = jax.random.split(key, 4)
    params = {
        # fc1: kaiming_normal_(mode='fan_out') -> std = sqrt(2 / (out_ch * k))
        'fc1_w': jax.random.normal(k1, (hidden, start_planes, kw), jnp.float32)
                 * math.sqrt(2.0 / (hidden * kw)),
        'bn_gamma': jnp.ones((hidden,), jnp.float32),
        'bn_beta': jnp.zeros((hidden,), jnp.float32),
        'bn_mean': jnp.zeros((hidden,), jnp.float32),
        'bn_var': jnp.ones((hidden,), jnp.float32),
        'fc2_w': jax.random.normal(k2, (K, hidden, 3), jnp.float32)
                 * math.sqrt(2.0 / (K * 3)),
        'fc2_b': jnp.zeros((K,), jnp.float32),
        # self.weight: per-expert kaiming_normal_ (fan_in) -> std = sqrt(2 / (Cin*kh*kw))
        'weight': jax.random.normal(k3, (K, O, Cin, kh, kw), jnp.float32)
                  * math.sqrt(2.0 / (Cin * kh * kw)),
    }
    x = jax.random.normal(kx, (B, Cin, H, W), jnp.float32)

    out = dynamic_conv2d(x, params, kernel_size=(kh, kw), stride=stride,
                         padding=padding, K=K, temperature=temperature)
    out = jax.block_until_ready(out)

    ref = _reference_forward(x, params, kernel_size=(kh, kw), stride=stride,
                             padding=padding, K=K, temperature=temperature)
    ref = jax.block_until_ready(ref)

    assert out.shape == (B, O, H, W), out.shape
    # Tolerance sized for bf16 matmul inputs (f32 accumulation); f32 path is ~1e-5.
    err = float(jnp.max(jnp.abs(out - ref)))
    assert err < 3e-2, f"max abs error vs reference too large: {err}"
    print("KERNEL_OK")
</pallas_src>

<mosaic_0001>
module attributes {stable_mosaic.version = 11 : i64} {
  func.func @_dynconv_kernel(%arg0: i32, %arg1: i32, %arg2: memref<1x36x128xbf16, #tpu.memory_space<vmem>>, %arg3: memref<48x36xbf16, #tpu.memory_space<vmem>>, %arg4: memref<1x6x16xf32, #tpu.memory_space<vmem>>, %arg5: memref<1x8x128xf32, #tpu.memory_space<vmem>>) attributes {dimension_semantics = [#tpu.dimension_semantics<parallel>, #tpu.dimension_semantics<parallel>], iteration_bounds = array<i64: 2, 2>, scalar_prefetch = 0 : i64, scratch_operands = 0 : i64, tpu.core_type = #tpu.core_type<tc>, window_params = [{transform_indices = @transform_0, window_bounds = array<i64: 1, 36, 128>}, {pipeline_mode = #tpu.pipeline_mode<synchronous>, transform_indices = @transform_1, window_bounds = array<i64: 48, 36>}, {transform_indices = @transform_2, window_bounds = array<i64: 1, 6, 16>}, {transform_indices = @transform_3, window_bounds = array<i64: 1, 8, 128>}]} {
    %c0 = arith.constant 0 : index
    %c0_0 = arith.constant 0 : index
    %0 = vector.load %arg3[%c0, %c0_0] : memref<48x36xbf16, #tpu.memory_space<vmem>>, vector<48x36xbf16>
    %c0_1 = arith.constant 0 : index
    %c0_2 = arith.constant 0 : index
    %c0_3 = arith.constant 0 : index
    %1 = vector.load %arg2[%c0_1, %c0_2, %c0_3] : memref<1x36x128xbf16, #tpu.memory_space<vmem>>, vector<1x36x128xbf16>
    %2 = vector.shape_cast %1 : vector<1x36x128xbf16> to vector<36x128xbf16>
    %cst = arith.constant dense<0.000000e+00> : vector<48x128xf32>
    %3 = tpu.matmul %0, %2, %cst {dimension_numbers = #tpu.dot_dimension_numbers<[1], [0], [0], [1], [0, 0, 1, 1], [], []>} : vector<48x36xbf16>, vector<36x128xbf16>, vector<48x128xf32> -> vector<48x128xf32>
    %c0_4 = arith.constant 0 : index
    %c0_5 = arith.constant 0 : index
    %c0_6 = arith.constant 0 : index
    %4 = vector.load %arg4[%c0_4, %c0_5, %c0_6] : memref<1x6x16xf32, #tpu.memory_space<vmem>>, vector<1x6x16xf32>
    %5 = vector.shape_cast %4 : vector<1x6x16xf32> to vector<6x16xf32>
    %6 = tpu.concatenate %5, %5, %5, %5, %5, %5, %5, %5 in 1 : vector<6x16xf32>, vector<6x16xf32>, vector<6x16xf32>, vector<6x16xf32>, vector<6x16xf32>, vector<6x16xf32>, vector<6x16xf32>, vector<6x16xf32> -> vector<6x128xf32>
    %7 = vector.shape_cast %3 : vector<48x128xf32> to vector<6x8x128xf32>
    %8 = vector.shape_cast %6 : vector<6x128xf32> to vector<6x1x128xf32>
    %9 = vector.broadcast %8 : vector<6x1x128xf32> to vector<6x8x128xf32>
    %10 = arith.mulf %7, %9 : vector<6x8x128xf32>
    %cst_7 = arith.constant dense<0.000000e+00> : vector<8x128xf32>
    %11 = vector.multi_reduction <add>, %10, %cst_7 [0] : vector<6x8x128xf32> to vector<8x128xf32>
    %c0_8 = arith.constant 0 : index
    %c0_9 = arith.constant 0 : index
    %c0_10 = arith.constant 0 : index
    %12 = vector.load %arg5[%c0_8, %c0_9, %c0_10] : memref<1x8x128xf32, #tpu.memory_space<vmem>>, vector<1x8x128xf32>
    %13 = vector.shape_cast %12 : vector<1x8x128xf32> to vector<8x128xf32>
    %14 = vector.shape_cast %11 : vector<8x128xf32> to vector<1x8x128xf32>
    tpu.vector_store %arg5[%c0_8, %c0_9, %c0_10], %14 {strides = array<i32>} : memref<1x8x128xf32, #tpu.memory_space<vmem>>, vector<1x8x128xf32>,
    return
  }
  func.func @transform_0(%arg0: i32, %arg1: i32) -> (i32, i32, i32) {
    %c0_i32 = arith.constant 0 : i32
    %c0_i32_0 = arith.constant 0 : i32
    return %arg0, %c0_i32, %arg1 : i32, i32, i32
  }
  func.func @transform_1(%arg0: i32, %arg1: i32) -> (i32, i32) {
    %c0_i32 = arith.constant 0 : i32
    %c0_i32_0 = arith.constant 0 : i32
    %c0_i32_1 = arith.constant 0 : i32
    return %c0_i32, %c0_i32_0 : i32, i32
  }
  func.func @transform_2(%arg0: i32, %arg1: i32) -> (i32, i32, i32) {
    %c0_i32 = arith.constant 0 : i32
    %c0_i32_0 = arith.constant 0 : i32
    %c0_i32_1 = arith.constant 0 : i32
    return %arg0, %c0_i32, %c0_i32_0 : i32, i32, i32
  }
  func.func @transform_3(%arg0: i32, %arg1: i32) -> (i32, i32, i32) {
    %c0_i32 = arith.constant 0 : i32
    %c0_i32_0 = arith.constant 0 : i32
    return %arg0, %c0_i32, %arg1 : i32, i32, i32
  }
}

</mosaic_0001>

<llo_original>
// kernel: tpu_custom_call.1
$region0: #{tpu_custom_call.1}
  #allocation0 [shape = 'u32[]', space=smem, size = 0x4, offset = 0x4, fixed_abs, tag = 'smem constant byte address 0x4 - core index']
  #allocation1 [shape = 'u32[144,128]{1,0:T(1,128)}', space=vmem, size = 0x12000, scoped, tag = 'internal scratch']
  %s0 = inlined_call_operand.vmem [shape: bf16[2,36,256], index: 0, kind: input, shape index: {}]
  %s1 = inlined_call_operand.vmem [shape: bf16[48,36], index: 1, kind: input, shape index: {}]
  %s2 = inlined_call_operand.vmem [shape: f32[2,6,16], index: 2, kind: input, shape index: {}]
  %s3 = inlined_call_operand.hbm [shape: f32[2,8,256], index: 3, kind: output, shape index: {}]
  %s4 = sld [smem:[#allocation0]]
  $region86: #{tpu_custom_call.1} parent=0
    _
  %s6 = ssub.s32 1, %s4
  %s7 = scalar_select 0, %s6, %s4
  $region1: #{tpu_custom_call.1} parent=0
    #allocation2 [shape = 'u8[20480]{0}', space=vmem, size = 0x5000, scoped, tag = 'input window, operand 0']
    #allocation3 [shape = 'u8[8192]{0}', space=vmem, size = 0x2000, scoped, tag = 'output window, operand 0']
    #allocation4 [shape = 's32[2]{0}', space=sflag, size = 0x8, scoped, tag = 'scoped memory for tpu_custom_call.1']
    %8 = vsyncpa [#allocation4], 0
    %s9 = scalar_lea.sflag [#allocation4], 1
    %10 = vsyncpa %s9, 0
    loop: start=0, step=1, limit=6
    $region2: #{tpu_custom_call.1} parent=1 // loop_pre_header
      _
    $region3: #{tpu_custom_call.1} parent=1 // loop_header
      %s12 = sphi 0, %s16
      %p13 = scmp.ge.s32.totalorder %s12, 6
      %s19 = sphi 0, %s31
      %s20 = sphi 0, %s27
      %s21 = sphi 0, %s19
      %s22 = sphi 0, %s20
      %s23 = sphi 0, %s21
      %s24 = sphi 0, %s22
      %s36 = sphi 0, %s38
      %s39 = sphi 0, %s36
      %s40 = sphi 0, %s39
      %s56 = sphi 0, %s40
      %s60 = sphi 0, %s60
      %s62 = sphi 0, %s60
      %s63 = sphi 0, %s62
      %s77 = sphi 0, %s63
      %s83 = sphi 0, %s85
      %s86 = sphi 0, %s83
      %s87 = sphi 0, %s86
      %s103 = sphi 0, %s87
      %s111 = sphi 0, %s113
      %s114 = sphi 0, %s111
      %s115 = sphi 0, %s114
      %s131 = sphi 0, %s115
    $region4: #{tpu_custom_call.1} parent=1 // loop_header_branch
      %15 = sbr.rel (%p13) target = $region8
    $region5: #{tpu_custom_call.1} parent=1 // loop_body
      %s17 = ssub.s32 %s12, 1
      %s18 = ssub.s32 %s12, 2
      %s25 = sadd.s32 1, %s20
      %p26 = scmp.ge.s32.totalorder %s25, 2
      %s27 = scalar_select %p26, 0, %s25
      %s28 = sadd.s32 1, %s19
      %s29 = scalar_select %p26, %s28, %s19
      %p30 = scmp.ge.s32.totalorder %s29, 2
      %s31 = scalar_select %p30, 0, %s29
      %s32 = ssub.s32 %s19, %s31
      %s33 = ssub.s32 %s20, %s27
      %s34 = sor.u32 %s32, %s33
      %p35 = scmp.eq.s32.totalorder %s34, 0
      %s37 = sadd.s32 %s36, 1
      %s38 = scalar_select %p35, %s36, %s37
      %p41 = pneg %p35
      %p42 = scmp.eq.s32.totalorder %s12, 3
      %p43 = por %p41, %p42
      %p44 = scmp.ne.s32.totalorder %s36, %s39
      %p45 = scmp.eq.s32.totalorder %s12, 0
      %p46 = por %p44, %p45
      %p47 = scmp.ne.s32.totalorder %s36, %s39
      %p48 = scmp.eq.s32.totalorder %s17, 3
      %p49 = por %p47, %p48
      %p50 = scmp.ne.s32.totalorder %s39, %s40
      %p51 = scmp.eq.s32.totalorder %s17, 0
      %p52 = por %p50, %p51
      %p53 = scmp.ne.s32.totalorder %s39, %s40
      %p54 = scmp.eq.s32.totalorder %s18, 3
      %p55 = por %p53, %p54
      %p57 = scmp.ne.s32.totalorder %s40, %s56
      %p58 = scmp.eq.s32.totalorder %s18, 0
      %p59 = por %p57, %p58
      %s61 = sadd.s32 %s60, 1
      %p64 = scmp.eq.s32.totalorder %s12, 3
      %p65 = scmp.ne.s32.totalorder %s60, %s62
      %p66 = scmp.eq.s32.totalorder %s12, 0
      %p67 = por %p65, %p66
      %p68 = scmp.ne.s32.totalorder %s60, %s62
      %p69 = scmp.eq.s32.totalorder %s17, 3
      %p70 = por %p68, %p69
      %p71 = scmp.ne.s32.totalorder %s62, %s63
      %p72 = scmp.eq.s32.totalorder %s17, 0
      %p73 = por %p71, %p72
      %p74 = scmp.ne.s32.totalorder %s62, %s63
      %p75 = scmp.eq.s32.totalorder %s18, 3
      %p76 = por %p74, %p75
      %p78 = scmp.ne.s32.totalorder %s63, %s77
      %p79 = scmp.eq.s32.totalorder %s18, 0
      %p80 = por %p78, %p79
      %s81 = ssub.s32 %s19, %s31
      %p82 = scmp.eq.s32.totalorder %s81, 0
      %s84 = sadd.s32 %s83, 1
      %s85 = scalar_select %p82, %s83, %s84
      %p88 = pneg %p82
      %p89 = scmp.eq.s32.totalorder %s12, 3
      %p90 = por %p88, %p89
      %p91 = scmp.ne.s32.totalorder %s83, %s86
      %p92 = scmp.eq.s32.totalorder %s12, 0
      %p93 = por %p91, %p92
      %p94 = scmp.ne.s32.totalorder %s83, %s86
      %p95 = scmp.eq.s32.totalorder %s17, 3
      %p96 = por %p94, %p95
      %p97 = scmp.ne.s32.totalorder %s86, %s87
      %p98 = scmp.eq.s32.totalorder %s17, 0
      %p99 = por %p97, %p98
      %p100 = scmp.ne.s32.totalorder %s86, %s87
      %p101 = scmp.eq.s32.totalorder %s18, 3
      %p102 = por %p100, %p101
      %p104 = scmp.ne.s32.totalorder %s87, %s103
      %p105 = scmp.eq.s32.totalorder %s18, 0
      %p106 = por %p104, %p105
      %s107 = ssub.s32 %s19, %s31
      %s108 = ssub.s32 %s20, %s27
      %s109 = sor.u32 %s107, %s108
      %p110 = scmp.eq.s32.totalorder %s109, 0
      %s112 = sadd.s32 %s111, 1
      %s113 = scalar_select %p110, %s111, %s112
      %p116 = pneg %p110
      %p117 = scmp.eq.s32.totalorder %s12, 3
      %p118 = por %p116, %p117
      %p119 = scmp.ne.s32.totalorder %s111, %s114
      %p120 = scmp.eq.s32.totalorder %s12, 0
      %p121 = por %p119, %p120
      %p122 = scmp.ne.s32.totalorder %s111, %s114
      %p123 = scmp.eq.s32.totalorder %s17, 3
      %p124 = por %p122, %p123
      %p125 = scmp.ne.s32.totalorder %s114, %s115
      %p126 = scmp.eq.s32.totalorder %s17, 0
      %p127 = por %p125, %p126
      %p128 = scmp.ne.s32.totalorder %s114, %s115
      %p129 = scmp.eq.s32.totalorder %s18, 3
      %p130 = por %p128, %p129
      %p132 = scmp.ne.s32.totalorder %s115, %s131
      %p133 = scmp.eq.s32.totalorder %s18, 0
      %p134 = por %p132, %p133
      %p135 = scmp.le.s32.totalorder 1, %s12
      %p136 = scmp.lt.s32.totalorder %s12, 5
      %p137 = pnand %p135, %p136
      %p138 = pneg %p137
      // Predicated region
      $region9: #{tpu_custom_call.1} parent=5 // pred_check
        _
      $region10: #{tpu_custom_call.1} parent=5 // pred_check_branch
        %140 = sbr.rel (%p137) target = $region12
      $region11: #{tpu_custom_call.1} parent=5 // pred_region
        %s141 = ssub.s32 %s12, 1
        // Predicated region
        $region13: #{tpu_custom_call.1} parent=11 // pred_check
          %p142 = pneg %p73
        $region14: #{tpu_custom_call.1} parent=11 // pred_check_branch
          %144 = sbr.rel (%p142) target = $region16
        $region15: #{tpu_custom_call.1} parent=11 // pred_region
          _
        $region16: #{tpu_custom_call.1} parent=11 // pred_fallthru
          _
      $region12: #{tpu_custom_call.1} parent=5 // pred_fallthru
        _
      %p145 = scmp.lt.s32.totalorder %s12, 4
      // Predicated region
      $region17: #{tpu_custom_call.1} parent=5 // pred_check
        %p146 = pneg %p145
      $region18: #{tpu_custom_call.1} parent=5 // pred_check_branch
        %148 = sbr.rel (%p146) target = $region20
      $region19: #{tpu_custom_call.1} parent=5 // pred_region
        // Predicated region
        $region21: #{tpu_custom_call.1} parent=19 // pred_check
          %p149 = pneg %p46
        $region22: #{tpu_custom_call.1} parent=19 // pred_check_branch
          %151 = sbr.rel (%p149) target = $region24
        $region23: #{tpu_custom_call.1} parent=19 // pred_region
          %s152 = sand.u32 %s36, 1
          %s153 = sand.u32 %s36, 1
          %s154 = smul.addr %s153, 20
          %s155 = scalar_lea.vmem [#allocation2], %s154
          %s156 = smul.addr %s19, 10
          %s157 = sadd.s32 %s20, %s156
          %s158 = smul.addr %s157, 4
          %s159 = scalar_lea.vmem %s0, %s158
          // Predicated region
          $region25: #{tpu_custom_call.1} parent=23 // pred_check
            _
          $region26: #{tpu_custom_call.1} parent=23 // pred_check_branch
            %161 = sbr.rel (0) target = $region28
          $region27: #{tpu_custom_call.1} parent=23 // pred_region
            // Predicated region
            $region29: #{tpu_custom_call.1} parent=27 // pred_check
              _
            $region30: #{tpu_custom_call.1} parent=27 // pred_check_branch
              %163 = sbr.rel target = $region32
            $region31: #{tpu_custom_call.1} parent=27 // pred_region
              // Predicated region
              $region44: #{tpu_custom_call.1} parent=31 // pred_check
                _
              $region45: #{tpu_custom_call.1} parent=31 // pred_check_branch
                %186 = sbr.rel (0) target = $region47
              $region46: #{tpu_custom_call.1} parent=31 // pred_region
                loop: start=0, step=1, limit=1
                $region48: #{tpu_custom_call.1} parent=46 // loop_pre_header
                  _
                $region49: #{tpu_custom_call.1} parent=46 // loop_header
                  %s188 = sphi 0, %s192
                  %p189 = scmp.ge.s32.totalorder %s188, 1
                  %s193 = sphi %s159, %s159
                  %s194 = sphi %s155, %s155
                $region50: #{tpu_custom_call.1} parent=46 // loop_header_branch
                  %191 = sbr.rel (%p189) target = $region54
                $region51: #{tpu_custom_call.1} parent=46 // loop_body
                  _
                $region52: #{tpu_custom_call.1} parent=46 // loop_footer
                  %s192 = sadd.s32 1, %s188
                $region53: #{tpu_custom_call.1} parent=46 // loop_footer_branch
                  %187 = sbr.rel target = $region49
                $region54: #{tpu_custom_call.1} parent=46 // loop_exit
                  _
                loop: start=0, step=1, limit=1
                $region55: #{tpu_custom_call.1} parent=46 // loop_pre_header
                  _
                $region56: #{tpu_custom_call.1} parent=46 // loop_header
                  %s197 = sphi 0, %s201
                  %p198 = scmp.ge.s32.totalorder %s197, 1
                  %s202 = sphi %s159, %s159
                  %s203 = sphi %s155, %s155
                $region57: #{tpu_custom_call.1} parent=46 // loop_header_branch
                  %200 = sbr.rel (%p198) target = $region61
                $region58: #{tpu_custom_call.1} parent=46 // loop_body
                  %v204 = vld [vmem:[%s202] sm:$0xf]
                  %205 = vst [vmem:[%s203] sm:$0xf] %v204
                  %v206 = vld [vmem:[%s202 + $0x8] sm:$0xf]
                  %207 = vst [vmem:[%s203 + $0x4] sm:$0xf] %v206
                  %v208 = vld [vmem:[%s202 + $0x10] sm:$0xf]
                  %209 = vst [vmem:[%s203 + $0x8] sm:$0xf] %v208
                  %v210 = vld [vmem:[%s202 + $0x18] sm:$0xf]
                  %211 = vst [vmem:[%s203 + $0xc] sm:$0xf] %v210
                  %v212 = vld [vmem:[%s202 + $0x20] sm:$0xf]
                  %213 = vst [vmem:[%s203 + $0x10] sm:$0xf] %v212
                $region59: #{tpu_custom_call.1} parent=46 // loop_footer
                  %s201 = sadd.s32 1, %s197
                $region60: #{tpu_custom_call.1} parent=46 // loop_footer_branch
                  %196 = sbr.rel target = $region56
                $region61: #{tpu_custom_call.1} parent=46 // loop_exit
                  _
              $region47: #{tpu_custom_call.1} parent=31 // pred_fallthru
                _
            $region32: #{tpu_custom_call.1} parent=27 // pred_fallthru
              _
            // Predicated region
            $region33: #{tpu_custom_call.1} parent=27 // pred_check
              _
            $region34: #{tpu_custom_call.1} parent=27 // pred_check_branch
              %165 = sbr.rel (0) target = $region36
            $region35: #{tpu_custom_call.1} parent=27 // pred_region
              loop: start=0, step=1, limit=1
              $region37: #{tpu_custom_call.1} parent=35 // loop_pre_header
                _
              $region38: #{tpu_custom_call.1} parent=35 // loop_header
                %s168 = sphi 0, %s172
                %p169 = scmp.ge.s32.totalorder %s168, 1
                %s173 = sphi %s159, %s159
                %s174 = sphi %s155, %s155
              $region39: #{tpu_custom_call.1} parent=35 // loop_header_branch
                %171 = sbr.rel (%p169) target = $region43
              $region40: #{tpu_custom_call.1} parent=35 // loop_body
                %v175 = vld [vmem:[%s173] sm:$0xf]
                %176 = vst [vmem:[%s174] sm:$0xf] %v175
                %v177 = vld [vmem:[%s173 + $0x8] sm:$0xf]
                %178 = vst [vmem:[%s174 + $0x4] sm:$0xf] %v177
                %v179 = vld [vmem:[%s173 + $0x10] sm:$0xf]
                %180 = vst [vmem:[%s174 + $0x8] sm:$0xf] %v179
                %v181 = vld [vmem:[%s173 + $0x18] sm:$0xf]
                %182 = vst [vmem:[%s174 + $0xc] sm:$0xf] %v181
                %v183 = vld [vmem:[%s173 + $0x20] sm:$0xf]
                %184 = vst [vmem:[%s174 + $0x10] sm:$0xf] %v183
              $region41: #{tpu_custom_call.1} parent=35 // loop_footer
                %s172 = sadd.s32 1, %s168
              $region42: #{tpu_custom_call.1} parent=35 // loop_footer_branch
                %167 = sbr.rel target = $region38
              $region43: #{tpu_custom_call.1} parent=35 // loop_exit
                _
            $region36: #{tpu_custom_call.1} parent=27 // pred_fallthru
              _
          $region28: #{tpu_custom_call.1} parent=23 // pred_fallthru
            _
          %214 = vnop
        $region24: #{tpu_custom_call.1} parent=19 // pred_fallthru
          _
        // Predicated region
        $region62: #{tpu_custom_call.1} parent=19 // pred_check
          %p215 = pneg %p93
        $region63: #{tpu_custom_call.1} parent=19 // pred_check_branch
          %217 = sbr.rel (%p215) target = $region65
        $region64: #{tpu_custom_call.1} parent=19 // pred_region
          %p218 = scmp.lt.s32.totalorder %s19, 1
          %s219 = scalar_select %p218, %s19, 1
          %s220 = smul.addr %s219, 8
          %s221 = scalar_lea.vmem %s2, %s220
        $region65: #{tpu_custom_call.1} parent=19 // pred_fallthru
          _
      $region20: #{tpu_custom_call.1} parent=5 // pred_fallthru
        _
      %p222 = scmp.le.s32.totalorder 1, %s12
      %p223 = scmp.lt.s32.totalorder %s12, 5
      %p224 = pnand %p222, %p223
      %p225 = pneg %p224
      // Predicated region
      $region66: #{tpu_custom_call.1} parent=5 // pred_check
        _
      $region67: #{tpu_custom_call.1} parent=5 // pred_check_branch
        %227 = sbr.rel (%p224) target = $region69
      $region68: #{tpu_custom_call.1} parent=5 // pred_region
        %s228 = ssub.s32 %s12, 1
        %s229 = sand.u32 %s39, 1
        %s230 = sand.u32 %s39, 1
        %s231 = smul.addr %s230, 20
        %s232 = scalar_lea.vmem [#allocation2], %s231
        // Predicated region
        $region70: #{tpu_custom_call.1} parent=68 // pred_check
          %p233 = pneg %p52
        $region71: #{tpu_custom_call.1} parent=68 // pred_check_branch
          %235 = sbr.rel (%p233) target = $region73
        $region72: #{tpu_custom_call.1} parent=68 // pred_region
          _
        $region73: #{tpu_custom_call.1} parent=68 // pred_fallthru
          _
        %s236 = sand.u32 %s39, 1
        %s237 = sand.u32 %s39, 1
        %s238 = smul.addr %s237, 20
        %s239 = scalar_lea.vmem [#allocation2], %s238
        %p240 = pneg %p52
        %p241 = pneg %p49
        %p242 = pneg %p73
        %p243 = pneg %p70
        %p244 = scmp.lt.s32.totalorder %s21, 1
        %s245 = scalar_select %p244, %s21, 1
        %s246 = smul.addr %s245, 8
        %s247 = scalar_lea.vmem %s2, %s246
        %p248 = pneg %p99
        %p249 = pneg %p96
        %p250 = pneg %p127
        %p251 = pneg %p124
        %s252 = sand.u32 %s114, 1
        %s253 = scalar_lea.sflag [#allocation4], %s252
        %s254 = sand.u32 %s114, 1
        %s255 = smul.addr %s254, 8
        %s256 = scalar_lea.vmem [#allocation3], %s255
        %p257 = scmp.lt.s32.totalorder %s21, 1
        %s258 = scalar_select %p257, %s21, 1
        %s259 = smul.addr %s258, 8
        %s260 = scalar_lea.vmem %s2, %s259
        %v262 = vld [vmem:[%s1] sm:$0xf]
        %v263 = vld [vmem:[%s1 + $0x4] sm:$0xf]
        %v264 = vld [vmem:[%s1 + $0x8] sm:$0xf]
        %v265 = vld [vmem:[%s1 + $0xc] sm:$0xf]
        %v266 = vld [vmem:[%s1 + $0x10] sm:$0xf]
        %v267 = vld [vmem:[%s1 + $0x14] sm:$0xf]
        %v268 = vld [vmem:[%s232] sm:$0xf]
        %v269 = vld [vmem:[%s232 + $0x4] sm:$0xf]
        %v270 = vld [vmem:[%s232 + $0x8] sm:$0xf]
        %v271 = vld [vmem:[%s232 + $0xc] sm:$0xf]
        %v272 = vld [vmem:[%s232 + $0x10] sm:$0x3]
        %v279 = vunpack.c.l.b16 %v262
        %v280 = vunpack.c.l.b16 %v263
        %v281 = vunpack.c.l.b16 %v264
        %v282 = vunpack.c.l.b16 %v265
        %v283 = vunpack.c.l.b16 %v266
        %v284 = vunpack.c.l.b16 %v267
        %v285 = vpack.c.b16 %v280, %v279
        %v286 = vpack.c.b16 %v282, %v281
        %v287 = vpack.c.b16 %v284, %v283
        %v293 = vunpack.c.l.b16 %v268
        %v294 = vunpack.c.l.b16 %v269
        %v295 = vunpack.c.l.b16 %v270
        %v296 = vunpack.c.l.b16 %v271
        %v297 = vunpack.c.l.b16 %v272
        %v298 = vpack.c.b16 %v294, %v293
        %v299 = vpack.c.b16 %v296, %v295
        %v300 = vpack.c.b16 %v297, %v297
        %vm303 = vcmask 293888
        %v305 = vsel %vm303, %v285, 0
        %v308 = vsel %vm303, %v286, 0
        %v311 = vsel %vm303, %v287, 0
        %vm313 = vcmask 1041408
        %v315 = vsel %vm313, %v300, 0
        %317 = vmatprep.subr.bf16.mxu0 0
        %318 = vmatpush1.bf16.msra.mxu0 %v298
        %319 = vmatprep.subr.bf16.mxu0 0
        %320 = vmatpush1.bf16.msra.mxu0 %v299
        %321 = vmatprep.subr.bf16.mxu0 0
        %322 = vmatpush1.bf16.msra.mxu0 %v315
        %323 = vmatprep.subr.bf16.mxu0 0
        %324 = vmatpush1.bf16.msra.mxu0 0
        %325 = vmatprep.subr.bf16.mxu0 0
        %326 = vmatpush1.bf16.msra.mxu0 0
        %327 = vmatprep.subr.bf16.mxu0 0
        %328 = vmatpush1.bf16.msra.mxu0 0
        %329 = vmatprep.subr.bf16.mxu0 0
        %330 = vmatpush1.bf16.msra.mxu0 0
        %331 = vmatprep.subr.bf16.mxu0 0
        %332 = vmatpush1.bf16.msra.mxu0 0
        %333 = vmatprep.subr.bf16.mxu0 0
        %334 = vmatpush1.bf16.msra.mxu0 0
        %335 = vmatprep.subr.bf16.mxu0 0
        %336 = vmatpush1.bf16.msra.mxu0 0
        %337 = vmatprep.subr.bf16.mxu0 0
        %338 = vmatpush1.bf16.msra.mxu0 0
        %339 = vmatprep.subr.bf16.mxu0 0
        %340 = vmatpush1.bf16.msra.mxu0 0
        %341 = vmatprep.subr.bf16.mxu0 0
        %342 = vmatpush1.bf16.msra.mxu0 0
        %343 = vmatprep.subr.bf16.mxu0 0
        %344 = vmatpush1.bf16.msra.mxu0 0
        %345 = vmatprep.subr.bf16.mxu0 0
        %346 = vmatpush1.bf16.msra.mxu0 0
        %347 = vmatprep.subr.bf16.mxu0 0
        %348 = vmatpush1.bf16.msra.mxu0 0
        %349 = vmatprep.mubr.bf16.mxu0 0
        %350 = vmatmul.mubr.bf16.gmra.mrb[0].mxu0 %v305
        %v351 = vpop.f32.mrb[0].mxu0
        %v352 = vadd.f32 0.0, %v351
        %v353 = vpop.f32.mrb[0].mxu0
        %v354 = vpop.f32.mrb[0].mxu0
        %v355 = vadd.f32 0.0, %v354
        %v356 = vpop.f32.mrb[0].mxu0
        %357 = vmatprep.mubr.bf16.mxu0 0
        %358 = vmatmul.mubr.bf16.gmra.mrb[0].mxu0 %v308
        %v359 = vpop.f32.mrb[0].mxu0
        %v360 = vadd.f32 0.0, %v359
        %v361 = vpop.f32.mrb[0].mxu0
        %v362 = vpop.f32.mrb[0].mxu0
        %v363 = vadd.f32 0.0, %v362
        %v364 = vpop.f32.mrb[0].mxu0
        %365 = vmatprep.mubr.bf16.mxu0 0
        %366 = vmatmul.mubr.bf16.gmra.mrb[0].mxu0 %v311
        %v367 = vpop.f32.mrb[0].mxu0
        %v368 = vadd.f32 0.0, %v367
        %v369 = vpop.f32.mrb[0].mxu0
        %v370 = vpop.f32.mrb[0].mxu0
        %v371 = vadd.f32 0.0, %v370
        %v372 = vpop.f32.mrb[0].mxu0
        %373 = vdwg.mxu0
        %v374 = vld [vmem:[%s260] sm:$0x3f]
        %376 = vrot.lane.b32.xlu0 %v374, 16
        %v377 = vpop.permute.xlu0 %376
        %379 = vrot.lane.b32.xlu0 %v374, 32
        %v380 = vpop.permute.xlu0 %379
        %382 = vrot.lane.b32.xlu0 %v374, 48
        %v383 = vpop.permute.xlu0 %382
        %385 = vrot.lane.b32.xlu0 %v374, 64
        %v386 = vpop.permute.xlu0 %385
        %388 = vrot.lane.b32.xlu0 %v374, 80
        %v389 = vpop.permute.xlu0 %388
        %391 = vrot.lane.b32.xlu0 %v374, 96
        %v392 = vpop.permute.xlu0 %391
        %394 = vrot.lane.b32.xlu0 %v374, 112
        %v395 = vpop.permute.xlu0 %394
        %vm397 = vcmask 130048
        %v398 = vsel %vm397, %v374, %v377
        %vm399 = vcmask 261120
        %v400 = vsel %vm399, %v398, %v380
        %vm401 = vcmask 392192
        %v402 = vsel %vm401, %v400, %v383
        %vm403 = vcmask 523264
        %v404 = vsel %vm403, %v402, %v386
        %vm405 = vcmask 654336
        %v406 = vsel %vm405, %v404, %v389
        %vm407 = vcmask 785408
        %v408 = vsel %vm407, %v406, %v392
        %vm409 = vcmask 916480
        %v410 = vsel %vm409, %v408, %v395
        %v412 = vcombine.high %v410, %v410
        %v414 = vunpack.c.l.s4 1966171168
        %v415 = vunpack.c.0.s8 %v414
        %v416 = vlaneseq
        %v417 = vshrl.u32 %v416, 7
        %v418 = vsub.s32 %v415, %v417
        %v419 = vrot.slane %v410, %v418
        %v421 = vunpack.c.l.s4 1966171168
        %v422 = vunpack.c.0.s8 %v421
        %v423 = vlaneseq
        %v424 = vshrl.u32 %v423, 7
        %v425 = vsub.s32 %v422, %v424
        %v426 = vrot.slane %v412, %v425
        %v427 = vcombine.high %v419, %v419
        %v428 = vcombine.high %v426, %v426
        %v430 = vunpack.c.l.s4 1966171168
        %v431 = vunpack.c.0.s8 %v430
        %v432 = vlaneseq
        %v433 = vshrl.u32 %v432, 7
        %v434 = vsub.s32 %v431, %v433
        %v435 = vrot.slane %v419, %v434
        %v437 = vunpack.c.l.s4 1966171168
        %v438 = vunpack.c.0.s8 %v437
        %v439 = vlaneseq
        %v440 = vshrl.u32 %v439, 7
        %v441 = vsub.s32 %v438, %v440
        %v442 = vrot.slane %v426, %v441
        %v444 = vunpack.c.l.s4 1966171168
        %v445 = vunpack.c.0.s8 %v444
        %v446 = vlaneseq
        %v447 = vshrl.u32 %v446, 7
        %v448 = vsub.s32 %v445, %v447
        %v449 = vrot.slane %v427, %v448
        %v451 = vunpack.c.l.s4 1966171168
        %v452 = vunpack.c.0.s8 %v451
        %v453 = vlaneseq
        %v454 = vshrl.u32 %v453, 7
        %v455 = vsub.s32 %v452, %v454
        %v456 = vrot.slane %v428, %v455
        %v457 = vcombine.high %v435, %v435
        %v458 = vcombine.high %v449, %v449
        %v459 = vlaneseq
        %v460 = vshrl.u32 %v459, 7
        %v461 = vsub.s32 0, %v460
        %v462 = vrot.slane %v435, %v461
        %v463 = vlaneseq
        %v464 = vshrl.u32 %v463, 7
        %v465 = vsub.s32 0, %v464
        %v466 = vrot.slane %v449, %v465
        %v467 = vlaneseq
        %v468 = vshrl.u32 %v467, 7
        %v469 = vsub.s32 0, %v468
        %v470 = vrot.slane %v457, %v469
        %v471 = vlaneseq
        %v472 = vshrl.u32 %v471, 7
        %v473 = vsub.s32 0, %v472
        %v474 = vrot.slane %v458, %v473
        %v475 = vlaneseq
        %v476 = vshrl.u32 %v475, 7
        %v477 = vsub.s32 0, %v476
        %v478 = vrot.slane %v442, %v477
        %v479 = vlaneseq
        %v480 = vshrl.u32 %v479, 7
        %v481 = vsub.s32 0, %v480
        %v482 = vrot.slane %v456, %v481
        %v489 = vmul.f32 %v352, %v462
        %v490 = vmul.f32 %v355, %v466
        %v491 = vmul.f32 %v360, %v470
        %v492 = vmul.f32 %v363, %v474
        %v493 = vmul.f32 %v368, %v478
        %v494 = vmul.f32 %v371, %v482
        %v495 = vadd.f32 %v489, %v490
        %v496 = vadd.f32 %v495, %v491
        %v497 = vadd.f32 %v496, %v492
        %v498 = vadd.f32 %v497, %v493
        %v499 = vadd.f32 %v498, %v494
        %500 = vst [vmem:[%s256] sm:$0xff] %v499
        %s501 = sand.u32 %s114, 1
        %s502 = scalar_lea.sflag [#allocation4], %s501
        %s503 = sand.u32 %s114, 1
        %s504 = smul.addr %s503, 8
        %s505 = scalar_lea.vmem [#allocation3], %s504
        // Predicated region
        $region74: #{tpu_custom_call.1} parent=68 // pred_check
          %p506 = pneg %p124
        $region75: #{tpu_custom_call.1} parent=68 // pred_check_branch
          %508 = sbr.rel (%p506) target = $region77
        $region76: #{tpu_custom_call.1} parent=68 // pred_region
          %s510 = ssub.s32 128, 128
          %511 = vsyncadd %s502, %s510
          %s512 = smul.addr %s21, 2
          %s513 = sadd.s32 %s22, %s512
          %s514 = smul.addr %s513, 128
          %s515 = scalar_lea.hbm %s3, %s514
          %s517 = sshll.u32 %s505, 4
          %s518 = int_to_ptr.vmem [resolvable:$true] %s517
          %520 = dma.vmem_to_hbm [thread:$0]  %s518, 128, %s515, %s502
        $region77: #{tpu_custom_call.1} parent=68 // pred_fallthru
          _
      $region69: #{tpu_custom_call.1} parent=5 // pred_fallthru
        _
      %p521 = scmp.le.s32.totalorder 2, %s12
      // Predicated region
      $region78: #{tpu_custom_call.1} parent=5 // pred_check
        %p522 = pneg %p521
      $region79: #{tpu_custom_call.1} parent=5 // pred_check_branch
        %524 = sbr.rel (%p522) target = $region81
      $region80: #{tpu_custom_call.1} parent=5 // pred_region
        %s525 = ssub.s32 %s12, 2
        // Predicated region
        $region82: #{tpu_custom_call.1} parent=80 // pred_check
          %p526 = pneg %p130
        $region83: #{tpu_custom_call.1} parent=80 // pred_check_branch
          %528 = sbr.rel (%p526) target = $region85
        $region84: #{tpu_custom_call.1} parent=80 // pred_region
          %s529 = sand.u32 %s115, 1
          %s530 = scalar_lea.sflag [#allocation4], %s529
          %s531 = sand.u32 %s115, 1
          %s532 = smul.addr %s531, 8
          %s533 = scalar_lea.vmem [#allocation3], %s532
          %534 = dma.done %s530, 128
        $region85: #{tpu_custom_call.1} parent=80 // pred_fallthru
          _
      $region81: #{tpu_custom_call.1} parent=5 // pred_fallthru
        _
    $region6: #{tpu_custom_call.1} parent=1 // loop_footer
      %s16 = sadd.s32 1, %s12
    $region7: #{tpu_custom_call.1} parent=1 // loop_footer_branch
      %11 = sbr.rel target = $region3
    $region8: #{tpu_custom_call.1} parent=1 // loop_exit
      _
    %535 = vsyncpa [#allocation4], 1
    %s536 = scalar_lea.sflag [#allocation4], 1
    %537 = vsyncpa %s536, 1

</llo_original>
